<compile_context>
chip_gen: v7x
topology: tpu7x:2x2x1
jax: 0.10.0
libtpu: 0.0.40
codegen_flags: <defaults>
</compile_context>

<pallas_src>
import functools

import jax
import jax.numpy as jnp
from jax import lax
from jax.experimental import pallas as pl
from jax.experimental.pallas import tpu as pltpu

K = 5          # conv_transpose kernel size
PAD = 2        # stride=1 ConvTranspose2d(pad=2) == conv with padding K-1-2 = 2
SUB = 8        # sublane alignment for the tiny channel dims
LANE = 128     # lane alignment for the spatial axis
_VMEM_BLOCK_BUDGET = 12 * 1024 * 1024   # per-buffer-set cap; fits every gen's scoped VMEM


def _round_up(v, m):
    return ((v + m - 1) // m) * m


_NUM_CORES_CACHE = None


def _num_tensorcores():
    """Best-effort TensorCores-per-chip (v7x/v5p/v4-class: 2; v5e/v6e: 1)."""
    global _NUM_CORES_CACHE
    if _NUM_CORES_CACHE is None:
        cores = 1
        try:
            kind = jax.devices()[0].device_kind.lower()
            if ("v7" in kind) or ("v5p" in kind) or ("v4" in kind):
                cores = 2
        except Exception:
            pass
        _NUM_CORES_CACHE = cores
    return _NUM_CORES_CACHE


def _pick_batch_block(n, kkcinp, c2p, hwp, num_cores):
    """Largest batch-block B (divisor of n) whose double-buffered cols+out blocks fit
    the VMEM budget, while keeping >= num_cores grid steps on multi-TC chips."""
    per_b = 4 * hwp * (kkcinp + c2p)                       # f32 bytes of one batch element
    max_b_vmem = max(1, _VMEM_BLOCK_BUDGET // (2 * per_b))  # 2x for double buffering
    best = 1
    for b in range(1, n + 1):
        if n % b != 0 or b > max_b_vmem:
            continue
        steps = n // b
        if num_cores > 1 and steps < min(num_cores, n):
            continue                                        # keep both v7x TCs fed
        best = b
    return best


def fused_kernel(cols_ref, w1_ref, b1_ref, w2_ref, b2_ref, o_ref, *, batch_block):
    # cols_ref: (B, KKCinP, HWp)  im2col slab, lanes = padded H*W (lane-dense)
    # w1_ref  : (C1P, KKCinP)     flattened, padded conv_transpose weights
    # b1_ref  : (C1P, 1)
    # w2_ref  : (C2P, C1P)        sublane-padded 1x1 conv weights
    # b2_ref  : (C2P, 1)
    # o_ref   : (B, C2P, HWp)
    w1 = w1_ref[...]
    w2 = w2_ref[...]
    b1 = b1_ref[...]
    b2 = b2_ref[...]
    for b in range(batch_block):             # static, tiny trip count
        v1 = jnp.dot(w1, cols_ref[b], preferred_element_type=jnp.float32) + b1
        # exact GELU: 0.5 * x * (erf(x / sqrt(2)) + 1)   (matches the torch erf path)
        v6 = (v1 * 0.5) * (lax.erf(v1 * 0.7071067811865476) + 1.0)
        o_ref[b] = (jnp.dot(w2, v6, preferred_element_type=jnp.float32)
                    + b2).astype(o_ref.dtype)


@jax.jit
def model_forward(x, w_ct, b_ct, w_cv, b_cv):
    """x: (N, Cin, H, W) f32.  PyTorch-convention parameters:
       w_ct: (Cin, C1, K, K)  ConvTranspose2d weight,  b_ct: (C1,)
       w_cv: (C2, C1, 1, 1)   Conv2d(1x1) weight,      b_cv: (C2,)
    """
    N, Cin, H, W = x.shape
    C1 = w_ct.shape[1]
    C2 = w_cv.shape[0]
    KKCin = K * K * Cin
    HW = H * W
    C1P = _round_up(C1, SUB)
    C2P = _round_up(C2, SUB)
    KKCinP = _round_up(KKCin, SUB)           # 150 -> 160: aligned MXU contraction dim
    HWp = _round_up(HW, LANE)                # lane-dense, unmasked stores

    # ---- layout plumbing (batch-major throughout: NO transposes) ----
    xpad = jnp.pad(x, ((0, 0), (0, 0), (PAD, PAD), (PAD, PAD)))
    # im2col: cols[n, (kh*K+kw)*Cin + ci, h*W + w] = xpad[n, ci, h+kh, w+kw]
    patches = [xpad[:, :, kh:kh + H, kw:kw + W]
               for kh in range(K) for kw in range(K)]          # each (N, Cin, H, W)
    cols = jnp.stack(patches, axis=1).reshape(N, KKCin, HW)    # (N, K*K*Cin, H*W)
    cols = jnp.pad(cols, ((0, 0), (0, KKCinP - KKCin), (0, HWp - HW)))

    # conv_transpose(stride=1, pad=2) == conv with flipped, channel-swapped weights:
    # w1[co, (kh*K+kw)*Cin + ci] = w_ct[ci, co, K-1-kh, K-1-kw]
    w1 = jnp.transpose(w_ct[:, :, ::-1, ::-1], (1, 2, 3, 0)).reshape(C1, KKCin)
    w1p = jnp.zeros((C1P, KKCinP), x.dtype).at[:C1, :KKCin].set(w1)
    b1p = jnp.zeros((C1P, 1), x.dtype).at[:C1, 0].set(b_ct)
    w2p = jnp.zeros((C2P, C1P), x.dtype).at[:C2, :C1].set(w_cv.reshape(C2, C1))
    b2p = jnp.zeros((C2P, 1), x.dtype).at[:C2, 0].set(b_cv)

    B = _pick_batch_block(N, KKCinP, C2P, HWp, _num_tensorcores())
    grid = (N // B,)

    flops = 2 * N * HWp * (C1P * KKCinP + C2P * C1P)
    bytes_accessed = 4 * (N * KKCinP * HWp + N * C2P * HWp
                          + C1P * KKCinP + C2P * C1P + C1P + C2P)

    out = pl.pallas_call(
        functools.partial(fused_kernel, batch_block=B),
        out_shape=jax.ShapeDtypeStruct((N, C2P, HWp), x.dtype),
        grid=grid,
        in_specs=[
            pl.BlockSpec((B, KKCinP, HWp), lambda i: (i, 0, 0)),
            pl.BlockSpec((C1P, KKCinP), lambda i: (0, 0)),
            pl.BlockSpec((C1P, 1), lambda i: (0, 0)),
            pl.BlockSpec((C2P, C1P), lambda i: (0, 0)),
            pl.BlockSpec((C2P, 1), lambda i: (0, 0)),
        ],
        out_specs=pl.BlockSpec((B, C2P, HWp), lambda i: (i, 0, 0)),
        compiler_params=pltpu.CompilerParams(
            dimension_semantics=("parallel",),
            vmem_limit_bytes=32 * 1024 * 1024),
        cost_estimate=pl.CostEstimate(
            flops=flops,
            transcendentals=N * C1P * HWp,
            bytes_accessed=bytes_accessed),
    )(cols, w1p, b1p, w2p, b2p)

    # (N, C2P, HWp) -> (N, C2, H, W): drop channel/lane padding; no transposes.
    return out[:, :C2, :HW].reshape(N, C2, H, W)


def ref_forward(x, w_ct, b_ct, w_cv, b_cv):
    """Pure-JAX reference using XLA convolutions (independent of the kernel math)."""
    C1 = w_ct.shape[1]
    C2 = w_cv.shape[0]
    # conv_transpose (stride=1, pad=2) == conv with flipped weights, OIHW = (C1, Cin, K, K)
    w1 = jnp.transpose(w_ct[:, :, ::-1, ::-1], (1, 0, 2, 3))
    v1 = lax.conv_general_dilated(x, w1, (1, 1), ((PAD, PAD), (PAD, PAD)),
                                  dimension_numbers=("NCHW", "OIHW", "NCHW"))
    v1 = v1 + b_ct.reshape(1, C1, 1, 1)
    v6 = (v1 * 0.5) * (lax.erf(v1 * 0.7071067811865476) + 1.0)
    v7 = lax.conv_general_dilated(v6, w_cv, (1, 1), "VALID",
                                  dimension_numbers=("NCHW", "OIHW", "NCHW"))
    return v7 + b_cv.reshape(1, C2, 1, 1)


if __name__ == "__main__":
    # small shapes consistent with the module: N=2, Cin=6 -> C1=4 -> C2=6, H=W=16
    N, CIN, C1, C2, H, W = 2, 6, 4, 6, 16, 16

    key = jax.random.PRNGKey(0)
    kx, k1, k2, k3, k4 = jax.random.split(key, 5)

    x = jax.random.normal(kx, (N, CIN, H, W), jnp.float32)
    # deterministic synthetic parameter init (uniform, PyTorch-like scale)
    w_ct = jax.random.uniform(k1, (CIN, C1, K, K), jnp.float32, -0.1, 0.1)
    b_ct = jax.random.uniform(k2, (C1,), jnp.float32, -0.1, 0.1)
    w_cv = jax.random.uniform(k3, (C2, C1, 1, 1), jnp.float32, -0.1, 0.1)
    b_cv = jax.random.uniform(k4, (C2,), jnp.float32, -0.1, 0.1)

    out = jax.block_until_ready(model_forward(x, w_ct, b_ct, w_cv, b_cv))
    ref = jax.block_until_ready(ref_forward(x, w_ct, b_ct, w_cv, b_cv))

    assert out.shape == (N, C2, H, W), out.shape
    assert jnp.allclose(out, ref, rtol=1e-4, atol=1e-5), float(jnp.abs(out - ref).max())

    print("KERNEL_OK")
</pallas_src>

<mosaic_0001>
module attributes {stable_mosaic.version = 11 : i64} {
  func.func @fused_kernel(%arg0: i32, %arg1: memref<2x152x256xf32, #tpu.memory_space<vmem>>, %arg2: memref<8x152xf32, #tpu.memory_space<vmem>>, %arg3: memref<8x1xf32, #tpu.memory_space<vmem>>, %arg4: memref<8x8xf32, #tpu.memory_space<vmem>>, %arg5: memref<8x1xf32, #tpu.memory_space<vmem>>, %arg6: memref<2x8x256xf32, #tpu.memory_space<vmem>>) attributes {dimension_semantics = [#tpu.dimension_semantics<parallel>], iteration_bounds = array<i64: 1>, scalar_prefetch = 0 : i64, scratch_operands = 0 : i64, tpu.core_type = #tpu.core_type<tc>, window_params = [{transform_indices = @transform_0, window_bounds = array<i64: 2, 152, 256>}, {pipeline_mode = #tpu.pipeline_mode<synchronous>, transform_indices = @transform_1, window_bounds = array<i64: 8, 152>}, {pipeline_mode = #tpu.pipeline_mode<synchronous>, transform_indices = @transform_2, window_bounds = array<i64: 8, 1>}, {pipeline_mode = #tpu.pipeline_mode<synchronous>, transform_indices = @transform_3, window_bounds = array<i64: 8, 8>}, {pipeline_mode = #tpu.pipeline_mode<synchronous>, transform_indices = @transform_4, window_bounds = array<i64: 8, 1>}, {transform_indices = @transform_5, window_bounds = array<i64: 2, 8, 256>}]} {
    %c0 = arith.constant 0 : index
    %c0_0 = arith.constant 0 : index
    %0 = vector.load %arg2[%c0, %c0_0] : memref<8x152xf32, #tpu.memory_space<vmem>>, vector<8x152xf32>
    %c0_1 = arith.constant 0 : index
    %c0_2 = arith.constant 0 : index
    %1 = vector.load %arg4[%c0_1, %c0_2] : memref<8x8xf32, #tpu.memory_space<vmem>>, vector<8x8xf32>
    %c0_3 = arith.constant 0 : index
    %c0_4 = arith.constant 0 : index
    %2 = vector.load %arg3[%c0_3, %c0_4] : memref<8x1xf32, #tpu.memory_space<vmem>>, vector<8x1xf32>
    %c0_5 = arith.constant 0 : index
    %c0_6 = arith.constant 0 : index
    %3 = vector.load %arg5[%c0_5, %c0_6] : memref<8x1xf32, #tpu.memory_space<vmem>>, vector<8x1xf32>
    %c0_7 = arith.constant 0 : index
    %c0_8 = arith.constant 0 : index
    %c0_9 = arith.constant 0 : index
    %4 = vector.load %arg1[%c0_7, %c0_8, %c0_9] : memref<2x152x256xf32, #tpu.memory_space<vmem>>, vector<1x152x256xf32>
    %5 = vector.shape_cast %4 : vector<1x152x256xf32> to vector<152x256xf32>
    %cst = arith.constant dense<0.000000e+00> : vector<8x256xf32>
    %6 = tpu.matmul %0, %5, %cst {dimension_numbers = #tpu.dot_dimension_numbers<[1], [0], [0], [1], [0, 0, 1, 1], [], []>} : vector<8x152xf32>, vector<152x256xf32>, vector<8x256xf32> -> vector<8x256xf32>
    %7 = vector.broadcast %2 : vector<8x1xf32> to vector<8x256xf32>
    %8 = arith.addf %6, %7 : vector<8x256xf32>
    %cst_10 = arith.constant 5.000000e-01 : f32
    %9 = vector.broadcast %cst_10 : f32 to vector<8x256xf32>
    %10 = arith.mulf %8, %9 : vector<8x256xf32>
    %cst_11 = arith.constant 0.707106769 : f32
    %11 = vector.broadcast %cst_11 : f32 to vector<8x256xf32>
    %12 = arith.mulf %8, %11 : vector<8x256xf32>
    %13 = math.erf %12 : vector<8x256xf32>
    %cst_12 = arith.constant 1.000000e+00 : f32
    %14 = vector.broadcast %cst_12 : f32 to vector<8x256xf32>
    %15 = arith.addf %13, %14 : vector<8x256xf32>
    %16 = arith.mulf %10, %15 : vector<8x256xf32>
    %cst_13 = arith.constant dense<0.000000e+00> : vector<8x256xf32>
    %17 = tpu.matmul %1, %16, %cst_13 {dimension_numbers = #tpu.dot_dimension_numbers<[1], [0], [0], [1], [0, 0, 1, 1], [], []>} : vector<8x8xf32>, vector<8x256xf32>, vector<8x256xf32> -> vector<8x256xf32>
    %18 = vector.broadcast %3 : vector<8x1xf32> to vector<8x256xf32>
    %19 = arith.addf %17, %18 : vector<8x256xf32>
    %c0_14 = arith.constant 0 : index
    %c0_15 = arith.constant 0 : index
    %c0_16 = arith.constant 0 : index
    %20 = vector.load %arg6[%c0_14, %c0_15, %c0_16] : memref<2x8x256xf32, #tpu.memory_space<vmem>>, vector<1x8x256xf32>
    %21 = vector.shape_cast %20 : vector<1x8x256xf32> to vector<8x256xf32>
    %22 = vector.shape_cast %19 : vector<8x256xf32> to vector<1x8x256xf32>
    tpu.vector_store %arg6[%c0_14, %c0_15, %c0_16], %22 {strides = array<i32>} : memref<2x8x256xf32, #tpu.memory_space<vmem>>, vector<1x8x256xf32>,
    %c1 = arith.constant 1 : index
    %c0_17 = arith.constant 0 : index
    %c0_18 = arith.constant 0 : index
    %23 = vector.load %arg1[%c1, %c0_17, %c0_18] : memref<2x152x256xf32, #tpu.memory_space<vmem>>, vector<1x152x256xf32>
    %24 = vector.shape_cast %23 : vector<1x152x256xf32> to vector<152x256xf32>
    %cst_19 = arith.constant dense<0.000000e+00> : vector<8x256xf32>
    %25 = tpu.matmul %0, %24, %cst_19 {dimension_numbers = #tpu.dot_dimension_numbers<[1], [0], [0], [1], [0, 0, 1, 1], [], []>} : vector<8x152xf32>, vector<152x256xf32>, vector<8x256xf32> -> vector<8x256xf32>
    %26 = vector.broadcast %2 : vector<8x1xf32> to vector<8x256xf32>
    %27 = arith.addf %25, %26 : vector<8x256xf32>
    %cst_20 = arith.constant 5.000000e-01 : f32
    %28 = vector.broadcast %cst_20 : f32 to vector<8x256xf32>
    %29 = arith.mulf %27, %28 : vector<8x256xf32>
    %cst_21 = arith.constant 0.707106769 : f32
    %30 = vector.broadcast %cst_21 : f32 to vector<8x256xf32>
    %31 = arith.mulf %27, %30 : vector<8x256xf32>
    %32 = math.erf %31 : vector<8x256xf32>
    %cst_22 = arith.constant 1.000000e+00 : f32
    %33 = vector.broadcast %cst_22 : f32 to vector<8x256xf32>
    %34 = arith.addf %32, %33 : vector<8x256xf32>
    %35 = arith.mulf %29, %34 : vector<8x256xf32>
    %cst_23 = arith.constant dense<0.000000e+00> : vector<8x256xf32>
    %36 = tpu.matmul %1, %35, %cst_23 {dimension_numbers = #tpu.dot_dimension_numbers<[1], [0], [0], [1], [0, 0, 1, 1], [], []>} : vector<8x8xf32>, vector<8x256xf32>, vector<8x256xf32> -> vector<8x256xf32>
    %37 = vector.broadcast %3 : vector<8x1xf32> to vector<8x256xf32>
    %38 = arith.addf %36, %37 : vector<8x256xf32>
    %c1_24 = arith.constant 1 : index
    %c0_25 = arith.constant 0 : index
    %c0_26 = arith.constant 0 : index
    %39 = vector.load %arg6[%c1_24, %c0_25, %c0_26] : memref<2x8x256xf32, #tpu.memory_space<vmem>>, vector<1x8x256xf32>
    %40 = vector.shape_cast %39 : vector<1x8x256xf32> to vector<8x256xf32>
    %41 = vector.shape_cast %38 : vector<8x256xf32> to vector<1x8x256xf32>
    tpu.vector_store %arg6[%c1_24, %c0_25, %c0_26], %41 {strides = array<i32>} : memref<2x8x256xf32, #tpu.memory_space<vmem>>, vector<1x8x256xf32>,
    return
  }
  func.func @transform_0(%arg0: i32) -> (i32, i32, i32) {
    %c0_i32 = arith.constant 0 : i32
    %c0_i32_0 = arith.constant 0 : i32
    %c0_i32_1 = arith.constant 0 : i32
    return %arg0, %c0_i32, %c0_i32_0 : i32, i32, i32
  }
  func.func @transform_1(%arg0: i32) -> (i32, i32) {
    %c0_i32 = arith.constant 0 : i32
    %c0_i32_0 = arith.constant 0 : i32
    %c0_i32_1 = arith.constant 0 : i32
    return %c0_i32, %c0_i32_0 : i32, i32
  }
  func.func @transform_2(%arg0: i32) -> (i32, i32) {
    %c0_i32 = arith.constant 0 : i32
    %c0_i32_0 = arith.constant 0 : i32
    %c0_i32_1 = arith.constant 0 : i32
    return %c0_i32, %c0_i32_0 : i32, i32
  }
  func.func @transform_3(%arg0: i32) -> (i32, i32) {
    %c0_i32 = arith.constant 0 : i32
    %c0_i32_0 = arith.constant 0 : i32
    %c0_i32_1 = arith.constant 0 : i32
    return %c0_i32, %c0_i32_0 : i32, i32
  }
  func.func @transform_4(%arg0: i32) -> (i32, i32) {
    %c0_i32 = arith.constant 0 : i32
    %c0_i32_0 = arith.constant 0 : i32
    %c0_i32_1 = arith.constant 0 : i32
    return %c0_i32, %c0_i32_0 : i32, i32
  }
  func.func @transform_5(%arg0: i32) -> (i32, i32, i32) {
    %c0_i32 = arith.constant 0 : i32
    %c0_i32_0 = arith.constant 0 : i32
    %c0_i32_1 = arith.constant 0 : i32
    return %arg0, %c0_i32, %c0_i32_0 : i32, i32, i32
  }
}

</mosaic_0001>

<llo_original>
// kernel: model_forward.1
$region0: #{model_forward.1}
  #allocation0 [shape = 'u32[]', space=smem, size = 0x4, offset = 0x4, fixed_abs, tag = 'smem constant byte address 0x4 - core index']
  #allocation1 [shape = 'u32[144,128]{1,0:T(1,128)}', space=vmem, size = 0x12000, scoped, tag = 'internal scratch']
  %s0 = inlined_call_operand.vmem [shape: f32[2,152,256], index: 0, kind: input, shape index: {}]
  %s1 = inlined_call_operand.vmem [shape: f32[8,152], index: 1, kind: input, shape index: {}]
  %s2 = inlined_call_operand.vmem [shape: f32[8,1], index: 2, kind: input, shape index: {}]
  %s3 = inlined_call_operand.vmem [shape: f32[8,8], index: 3, kind: input, shape index: {}]
  %s4 = inlined_call_operand.vmem [shape: f32[8,1], index: 4, kind: input, shape index: {}]
  %s5 = inlined_call_operand.vmem [shape: f32[2,8,256], index: 5, kind: output, shape index: {}]
  %s6 = sld [smem:[#allocation0]]
  $region30: #{model_forward.1} parent=0
    _
  %s8 = ssub.s32 1, %s6
  %s9 = scalar_select 0, %s8, %s6
  // Predicated region
  $region2: #{model_forward.1} parent=0 // pred_check
    _
  $region3: #{model_forward.1} parent=0 // pred_check_branch
    %11 = sbr.rel (0) target = $region5
  $region4: #{model_forward.1} parent=0 // pred_region
    _
  $region5: #{model_forward.1} parent=0 // pred_fallthru
    _
  // Predicated region
  $region6: #{model_forward.1} parent=0 // pred_check
    _
  $region7: #{model_forward.1} parent=0 // pred_check_branch
    %13 = sbr.rel (0) target = $region9
  $region8: #{model_forward.1} parent=0 // pred_region
    _
  $region9: #{model_forward.1} parent=0 // pred_fallthru
    _
  // Predicated region
  $region10: #{model_forward.1} parent=0 // pred_check
    _
  $region11: #{model_forward.1} parent=0 // pred_check_branch
    %15 = sbr.rel (0) target = $region13
  $region12: #{model_forward.1} parent=0 // pred_region
    _
  $region13: #{model_forward.1} parent=0 // pred_fallthru
    _
  // Predicated region
  $region14: #{model_forward.1} parent=0 // pred_check
    _
  $region15: #{model_forward.1} parent=0 // pred_check_branch
    %17 = sbr.rel (0) target = $region17
  $region16: #{model_forward.1} parent=0 // pred_region
    _
  $region17: #{model_forward.1} parent=0 // pred_fallthru
    _
  // Predicated region
  $region18: #{model_forward.1} parent=0 // pred_check
    _
  $region19: #{model_forward.1} parent=0 // pred_check_branch
    %19 = sbr.rel (0) target = $region21
  $region20: #{model_forward.1} parent=0 // pred_region
    _
  $region21: #{model_forward.1} parent=0 // pred_fallthru
    _
  %v20 = vld [vmem:[%s1] sm:$0xff]
  %v21 = vld [vmem:[%s1 + $0x8] sm:$0xff]
  %v22 = vld [vmem:[%s3] sm:$0xff]
  %v23 = vld [vmem:[%s2] sm:$0xff]
  %v24 = vld [vmem:[%s4] sm:$0xff]
  %v25 = vld [vmem:[%s0] sm:$0xff]
  %v26 = vld [vmem:[%s0 + $0x8] sm:$0xff]
  %v27 = vld [vmem:[%s0 + $0x10] sm:$0xff]
  %v28 = vld [vmem:[%s0 + $0x18] sm:$0xff]
  %v29 = vld [vmem:[%s0 + $0x20] sm:$0xff]
  %v30 = vld [vmem:[%s0 + $0x28] sm:$0xff]
  %v31 = vld [vmem:[%s0 + $0x30] sm:$0xff]
  %v32 = vld [vmem:[%s0 + $0x38] sm:$0xff]
  %v33 = vld [vmem:[%s0 + $0x40] sm:$0xff]
  %v34 = vld [vmem:[%s0 + $0x48] sm:$0xff]
  %v35 = vld [vmem:[%s0 + $0x50] sm:$0xff]
  %v36 = vld [vmem:[%s0 + $0x58] sm:$0xff]
  %v37 = vld [vmem:[%s0 + $0x60] sm:$0xff]
  %v38 = vld [vmem:[%s0 + $0x68] sm:$0xff]
  %v39 = vld [vmem:[%s0 + $0x70] sm:$0xff]
  %v40 = vld [vmem:[%s0 + $0x78] sm:$0xff]
  %v41 = vld [vmem:[%s0 + $0x80] sm:$0xff]
  %v42 = vld [vmem:[%s0 + $0x88] sm:$0xff]
  %v43 = vld [vmem:[%s0 + $0x90] sm:$0xff]
  %v44 = vld [vmem:[%s0 + $0x98] sm:$0xff]
  %v45 = vld [vmem:[%s0 + $0xa0] sm:$0xff]
  %v46 = vld [vmem:[%s0 + $0xa8] sm:$0xff]
  %v47 = vld [vmem:[%s0 + $0xb0] sm:$0xff]
  %v48 = vld [vmem:[%s0 + $0xb8] sm:$0xff]
  %v49 = vld [vmem:[%s0 + $0xc0] sm:$0xff]
  %v50 = vld [vmem:[%s0 + $0xc8] sm:$0xff]
  %v51 = vld [vmem:[%s0 + $0xd0] sm:$0xff]
  %v52 = vld [vmem:[%s0 + $0xd8] sm:$0xff]
  %v53 = vld [vmem:[%s0 + $0xe0] sm:$0xff]
  %v54 = vld [vmem:[%s0 + $0xe8] sm:$0xff]
  %v55 = vld [vmem:[%s0 + $0xf0] sm:$0xff]
  %v56 = vld [vmem:[%s0 + $0xf8] sm:$0xff]
  %v57 = vld [vmem:[%s0 + $0x100] sm:$0xff]
  %v58 = vld [vmem:[%s0 + $0x108] sm:$0xff]
  %v59 = vld [vmem:[%s0 + $0x110] sm:$0xff]
  %v60 = vld [vmem:[%s0 + $0x118] sm:$0xff]
  %v61 = vld [vmem:[%s0 + $0x120] sm:$0xff]
  %v62 = vld [vmem:[%s0 + $0x128] sm:$0xff]
  %64 = vset.pattern.permute.xlu0 0
  %65 = vperm.xlu0 %64, %v23
  %v66 = vpop.permute.xlu0 %65
  %vm68 = vcmask 195584
  %v70 = vsel %vm68, %v21, 0
  %72 = vmatprep.subr.mxu0 %v26
  %73 = vmatpush1.msra.mxu0 %v25
  %74 = vmatprep.subr.mxu0 %v28
  %75 = vmatpush1.msra.mxu0 %v27
  %76 = vmatprep.subr.mxu0 %v30
  %77 = vmatpush1.msra.mxu0 %v29
  %78 = vmatprep.subr.mxu0 %v32
  %79 = vmatpush1.msra.mxu0 %v31
  %80 = vmatprep.subr.mxu0 %v34
  %81 = vmatpush1.msra.mxu0 %v33
  %82 = vmatprep.subr.mxu0 %v36
  %83 = vmatpush1.msra.mxu0 %v35
  %84 = vmatprep.subr.mxu0 %v38
  %85 = vmatpush1.msra.mxu0 %v37
  %86 = vmatprep.subr.mxu0 %v40
  %87 = vmatpush1.msra.mxu0 %v39
  %88 = vmatprep.subr.mxu0 %v42
  %89 = vmatpush1.msra.mxu0 %v41
  %90 = vmatprep.subr.mxu0 %v44
  %91 = vmatpush1.msra.mxu0 %v43
  %92 = vmatprep.subr.mxu0 %v46
  %93 = vmatpush1.msra.mxu0 %v45
  %94 = vmatprep.subr.mxu0 %v48
  %95 = vmatpush1.msra.mxu0 %v47
  %96 = vmatprep.subr.mxu0 %v50
  %97 = vmatpush1.msra.mxu0 %v49
  %98 = vmatprep.subr.mxu0 %v52
  %99 = vmatpush1.msra.mxu0 %v51
  %100 = vmatprep.subr.mxu0 %v54
  %101 = vmatpush1.msra.mxu0 %v53
  %102 = vmatprep.subr.mxu0 %v56
  %103 = vmatpush1.msra.mxu0 %v55
  %104 = vmatprep.subr.mxu0 %v58
  %105 = vmatpush1.msra.mxu0 %v57
  %106 = vmatprep.subr.mxu0 %v60
  %107 = vmatpush1.msra.mxu0 %v59
  %108 = vmatprep.subr.mxu0 %v62
  %109 = vmatpush1.msra.mxu0 %v61
  %110 = vmatprep.subr.mxu0 0.0
  %111 = vmatpush1.msra.mxu0 0.0
  %112 = vmatprep.subr.mxu0 0.0
  %113 = vmatpush1.msra.mxu0 0.0
  %114 = vmatprep.subr.mxu0 0.0
  %115 = vmatpush1.msra.mxu0 0.0
  %116 = vmatprep.subr.mxu0 0.0
  %117 = vmatpush1.msra.mxu0 0.0
  %118 = vmatprep.subr.mxu0 0.0
  %119 = vmatpush1.msra.mxu0 0.0
  %120 = vmatprep.subr.mxu0 0.0
  %121 = vmatpush1.msra.mxu0 0.0
  %122 = vmatprep.subr.mxu0 0.0
  %123 = vmatpush1.msra.mxu0 0.0
  %124 = vmatprep.subr.mxu0 0.0
  %125 = vmatpush1.msra.mxu0 0.0
  %126 = vmatprep.subr.mxu0 0.0
  %127 = vmatpush1.msra.mxu0 0.0
  %128 = vmatprep.subr.mxu0 0.0
  %129 = vmatpush1.msra.mxu0 0.0
  %130 = vmatprep.subr.mxu0 0.0
  %131 = vmatpush1.msra.mxu0 0.0
  %132 = vmatprep.subr.mxu0 0.0
  %133 = vmatpush1.msra.mxu0 0.0
  %134 = vmatprep.subr.mxu0 0.0
  %135 = vmatpush1.msra.mxu0 0.0
  %136 = vmatprep.mubr.f32.mxu0 %v70
  %137 = vmatmul.mubr.f32.gmra.mrb[0].mxu0 %v20
  %v138 = vpop.f32.mrb[0].mxu0
  %v139 = vadd.f32 %v66, %v138
  %v140 = vpop.f32.mrb[0].mxu0
  %v141 = vadd.f32 %v66, %v140
  %142 = vdwg.mxu0
  %v143 = vmul.f32 %v139, 0.5
  %v144 = vmul.f32 %v141, 0.5
  %v145 = vmul.f32 %v139, 0.70710677
  %v146 = vmul.f32 %v141, 0.70710677
  %v147 = verf.f32.pop %v145
  %v148 = verf.f32.pop %v146
  %v149 = vadd.f32 %v147, 1.0
  %v150 = vadd.f32 %v148, 1.0
  %v151 = vmul.f32 %v143, %v149
  %v152 = vmul.f32 %v144, %v150
  %154 = vset.pattern.permute.xlu0 0
  %155 = vperm.xlu0 %154, %v24
  %v156 = vpop.permute.xlu0 %155
  %vm158 = vcmask 64512
  %v160 = vsel %vm158, %v22, 0
  %162 = vmatprep.subr.mxu0 %v152
  %163 = vmatpush1.msra.mxu0 %v151
  %164 = vmatprep.subr.mxu0 0.0
  %165 = vmatpush1.msra.mxu0 0.0
  %166 = vmatprep.subr.mxu0 0.0
  %167 = vmatpush1.msra.mxu0 0.0
  %168 = vmatprep.subr.mxu0 0.0
  %169 = vmatpush1.msra.mxu0 0.0
  %170 = vmatprep.subr.mxu0 0.0
  %171 = vmatpush1.msra.mxu0 0.0
  %172 = vmatprep.subr.mxu0 0.0
  %173 = vmatpush1.msra.mxu0 0.0
  %174 = vmatprep.subr.mxu0 0.0
  %175 = vmatpush1.msra.mxu0 0.0
  %176 = vmatprep.subr.mxu0 0.0
  %177 = vmatpush1.msra.mxu0 0.0
  %178 = vmatprep.subr.mxu0 0.0
  %179 = vmatpush1.msra.mxu0 0.0
  %180 = vmatprep.subr.mxu0 0.0
  %181 = vmatpush1.msra.mxu0 0.0
  %182 = vmatprep.subr.mxu0 0.0
  %183 = vmatpush1.msra.mxu0 0.0
  %184 = vmatprep.subr.mxu0 0.0
  %185 = vmatpush1.msra.mxu0 0.0
  %186 = vmatprep.subr.mxu0 0.0
  %187 = vmatpush1.msra.mxu0 0.0
  %188 = vmatprep.subr.mxu0 0.0
  %189 = vmatpush1.msra.mxu0 0.0
  %190 = vmatprep.subr.mxu0 0.0
  %191 = vmatpush1.msra.mxu0 0.0
  %192 = vmatprep.subr.mxu0 0.0
  %193 = vmatpush1.msra.mxu0 0.0
  %194 = vmatprep.subr.mxu0 0.0
  %195 = vmatpush1.msra.mxu0 0.0
  %196 = vmatprep.subr.mxu0 0.0
  %197 = vmatpush1.msra.mxu0 0.0
  %198 = vmatprep.subr.mxu0 0.0
  %199 = vmatpush1.msra.mxu0 0.0
  %200 = vmatprep.subr.mxu0 0.0
  %201 = vmatpush1.msra.mxu0 0.0
  %202 = vmatprep.subr.mxu0 0.0
  %203 = vmatpush1.msra.mxu0 0.0
  %204 = vmatprep.subr.mxu0 0.0
  %205 = vmatpush1.msra.mxu0 0.0
  %206 = vmatprep.subr.mxu0 0.0
  %207 = vmatpush1.msra.mxu0 0.0
  %208 = vmatprep.subr.mxu0 0.0
  %209 = vmatpush1.msra.mxu0 0.0
  %210 = vmatprep.subr.mxu0 0.0
  %211 = vmatpush1.msra.mxu0 0.0
  %212 = vmatprep.subr.mxu0 0.0
  %213 = vmatpush1.msra.mxu0 0.0
  %214 = vmatprep.subr.mxu0 0.0
  %215 = vmatpush1.msra.mxu0 0.0
  %216 = vmatprep.subr.mxu0 0.0
  %217 = vmatpush1.msra.mxu0 0.0
  %218 = vmatprep.subr.mxu0 0.0
  %219 = vmatpush1.msra.mxu0 0.0
  %220 = vmatprep.subr.mxu0 0.0
  %221 = vmatpush1.msra.mxu0 0.0
  %222 = vmatprep.subr.mxu0 0.0
  %223 = vmatpush1.msra.mxu0 0.0
  %224 = vmatprep.subr.mxu0 0.0
  %225 = vmatpush1.msra.mxu0 0.0
  %226 = vmatprep.mubr.f32.mxu0 0.0
  %227 = vmatmul.mubr.f32.gmra.mrb[0].mxu0 %v160
  %v228 = vpop.f32.mrb[0].mxu0
  %v229 = vadd.f32 %v156, %v228
  %v230 = vpop.f32.mrb[0].mxu0
  %v231 = vadd.f32 %v156, %v230
  %232 = vdwg.mxu0
  %233 = vst [vmem:[%s5] sm:$0xff] %v229
  %234 = vst [vmem:[%s5 + $0x8] sm:$0xff] %v231
  %s235 = scalar_lea.vmem %s0, 304
  %v236 = vld [vmem:[%s235] sm:$0xff]
  %v237 = vld [vmem:[%s235 + $0x8] sm:$0xff]
  %v238 = vld [vmem:[%s235 + $0x10] sm:$0xff]
  %v239 = vld [vmem:[%s235 + $0x18] sm:$0xff]
  %v240 = vld [vmem:[%s235 + $0x20] sm:$0xff]
  %v241 = vld [vmem:[%s235 + $0x28] sm:$0xff]
  %v242 = vld [vmem:[%s235 + $0x30] sm:$0xff]
  %v243 = vld [vmem:[%s235 + $0x38] sm:$0xff]
  %v244 = vld [vmem:[%s235 + $0x40] sm:$0xff]
  %v245 = vld [vmem:[%s235 + $0x48] sm:$0xff]
  %v246 = vld [vmem:[%s235 + $0x50] sm:$0xff]
  %v247 = vld [vmem:[%s235 + $0x58] sm:$0xff]
  %v248 = vld [vmem:[%s235 + $0x60] sm:$0xff]
  %v249 = vld [vmem:[%s235 + $0x68] sm:$0xff]
  %v250 = vld [vmem:[%s235 + $0x70] sm:$0xff]
  %v251 = vld [vmem:[%s235 + $0x78] sm:$0xff]
  %v252 = vld [vmem:[%s235 + $0x80] sm:$0xff]
  %v253 = vld [vmem:[%s235 + $0x88] sm:$0xff]
  %v254 = vld [vmem:[%s235 + $0x90] sm:$0xff]
  %v255 = vld [vmem:[%s235 + $0x98] sm:$0xff]
  %v256 = vld [vmem:[%s235 + $0xa0] sm:$0xff]
  %v257 = vld [vmem:[%s235 + $0xa8] sm:$0xff]
  %v258 = vld [vmem:[%s235 + $0xb0] sm:$0xff]
  %v259 = vld [vmem:[%s235 + $0xb8] sm:$0xff]
  %v260 = vld [vmem:[%s235 + $0xc0] sm:$0xff]
  %v261 = vld [vmem:[%s235 + $0xc8] sm:$0xff]
  %v262 = vld [vmem:[%s235 + $0xd0] sm:$0xff]
  %v263 = vld [vmem:[%s235 + $0xd8] sm:$0xff]
  %v264 = vld [vmem:[%s235 + $0xe0] sm:$0xff]
  %v265 = vld [vmem:[%s235 + $0xe8] sm:$0xff]
  %v266 = vld [vmem:[%s235 + $0xf0] sm:$0xff]
  %v267 = vld [vmem:[%s235 + $0xf8] sm:$0xff]
  %v268 = vld [vmem:[%s235 + $0x100] sm:$0xff]
  %v269 = vld [vmem:[%s235 + $0x108] sm:$0xff]
  %v270 = vld [vmem:[%s235 + $0x110] sm:$0xff]
  %v271 = vld [vmem:[%s235 + $0x118] sm:$0xff]
  %v272 = vld [vmem:[%s235 + $0x120] sm:$0xff]
  %v273 = vld [vmem:[%s235 + $0x128] sm:$0xff]
  %274 = vmatprep.subr.mxu0 %v237
  %275 = vmatpush1.msra.mxu0 %v236
  %276 = vmatprep.subr.mxu0 %v239
  %277 = vmatpush1.msra.mxu0 %v238
  %278 = vmatprep.subr.mxu0 %v241
  %279 = vmatpush1.msra.mxu0 %v240
  %280 = vmatprep.subr.mxu0 %v243
  %281 = vmatpush1.msra.mxu0 %v242
  %282 = vmatprep.subr.mxu0 %v245
  %283 = vmatpush1.msra.mxu0 %v244
  %284 = vmatprep.subr.mxu0 %v247
  %285 = vmatpush1.msra.mxu0 %v246
  %286 = vmatprep.subr.mxu0 %v249
  %287 = vmatpush1.msra.mxu0 %v248
  %288 = vmatprep.subr.mxu0 %v251
  %289 = vmatpush1.msra.mxu0 %v250
  %290 = vmatprep.subr.mxu0 %v253
  %291 = vmatpush1.msra.mxu0 %v252
  %292 = vmatprep.subr.mxu0 %v255
  %293 = vmatpush1.msra.mxu0 %v254
  %294 = vmatprep.subr.mxu0 %v257
  %295 = vmatpush1.msra.mxu0 %v256
  %296 = vmatprep.subr.mxu0 %v259
  %297 = vmatpush1.msra.mxu0 %v258
  %298 = vmatprep.subr.mxu0 %v261
  %299 = vmatpush1.msra.mxu0 %v260
  %300 = vmatprep.subr.mxu0 %v263
  %301 = vmatpush1.msra.mxu0 %v262
  %302 = vmatprep.subr.mxu0 %v265
  %303 = vmatpush1.msra.mxu0 %v264
  %304 = vmatprep.subr.mxu0 %v267
  %305 = vmatpush1.msra.mxu0 %v266
  %306 = vmatprep.subr.mxu0 %v269
  %307 = vmatpush1.msra.mxu0 %v268
  %308 = vmatprep.subr.mxu0 %v271
  %309 = vmatpush1.msra.mxu0 %v270
  %310 = vmatprep.subr.mxu0 %v273
  %311 = vmatpush1.msra.mxu0 %v272
  %312 = vmatprep.subr.mxu0 0.0
  %313 = vmatpush1.msra.mxu0 0.0
  %314 = vmatprep.subr.mxu0 0.0
  %315 = vmatpush1.msra.mxu0 0.0
  %316 = vmatprep.subr.mxu0 0.0
  %317 = vmatpush1.msra.mxu0 0.0
  %318 = vmatprep.subr.mxu0 0.0
  %319 = vmatpush1.msra.mxu0 0.0
  %320 = vmatprep.subr.mxu0 0.0
  %321 = vmatpush1.msra.mxu0 0.0
  %322 = vmatprep.subr.mxu0 0.0
  %323 = vmatpush1.msra.mxu0 0.0
  %324 = vmatprep.subr.mxu0 0.0
  %325 = vmatpush1.msra.mxu0 0.0
  %326 = vmatprep.subr.mxu0 0.0
  %327 = vmatpush1.msra.mxu0 0.0
  %328 = vmatprep.subr.mxu0 0.0
  %329 = vmatpush1.msra.mxu0 0.0
  %330 = vmatprep.subr.mxu0 0.0
  %331 = vmatpush1.msra.mxu0 0.0
  %332 = vmatprep.subr.mxu0 0.0
  %333 = vmatpush1.msra.mxu0 0.0
  %334 = vmatprep.subr.mxu0 0.0
  %335 = vmatpush1.msra.mxu0 0.0
  %336 = vmatprep.subr.mxu0 0.0
  %337 = vmatpush1.msra.mxu0 0.0
  %338 = vmatprep.mubr.f32.mxu0 %v70
  %339 = vmatmul.mubr.f32.gmra.mrb[0].mxu0 %v20
  %v340 = vpop.f32.mrb[0].mxu0
  %v341 = vadd.f32 %v66, %v340
  %v342 = vpop.f32.mrb[0].mxu0
  %v343 = vadd.f32 %v66, %v342
  %344 = vdwg.mxu0
  %v345 = vmul.f32 %v341, 0.5
  %v346 = vmul.f32 %v343, 0.5
  %v347 = vmul.f32 %v341, 0.70710677
  %v348 = vmul.f32 %v343, 0.70710677
  %v349 = verf.f32.pop %v347
  %v350 = verf.f32.pop %v348
  %v351 = vadd.f32 %v349, 1.0
  %v352 = vadd.f32 %v350, 1.0
  %v353 = vmul.f32 %v345, %v351
  %v354 = vmul.f32 %v346, %v352
  %355 = vmatprep.subr.mxu0 %v354
  %356 = vmatpush1.msra.mxu0 %v353
  %357 = vmatprep.subr.mxu0 0.0
  %358 = vmatpush1.msra.mxu0 0.0
  %359 = vmatprep.subr.mxu0 0.0
  %360 = vmatpush1.msra.mxu0 0.0
  %361 = vmatprep.subr.mxu0 0.0
  %362 = vmatpush1.msra.mxu0 0.0
  %363 = vmatprep.subr.mxu0 0.0
  %364 = vmatpush1.msra.mxu0 0.0
  %365 = vmatprep.subr.mxu0 0.0
  %366 = vmatpush1.msra.mxu0 0.0
  %367 = vmatprep.subr.mxu0 0.0
  %368 = vmatpush1.msra.mxu0 0.0
  %369 = vmatprep.subr.mxu0 0.0
  %370 = vmatpush1.msra.mxu0 0.0
  %371 = vmatprep.subr.mxu0 0.0
  %372 = vmatpush1.msra.mxu0 0.0
  %373 = vmatprep.subr.mxu0 0.0
  %374 = vmatpush1.msra.mxu0 0.0
  %375 = vmatprep.subr.mxu0 0.0
  %376 = vmatpush1.msra.mxu0 0.0
  %377 = vmatprep.subr.mxu0 0.0
  %378 = vmatpush1.msra.mxu0 0.0
  %379 = vmatprep.subr.mxu0 0.0
  %380 = vmatpush1.msra.mxu0 0.0
  %381 = vmatprep.subr.mxu0 0.0
  %382 = vmatpush1.msra.mxu0 0.0
  %383 = vmatprep.subr.mxu0 0.0
  %384 = vmatpush1.msra.mxu0 0.0
  %385 = vmatprep.subr.mxu0 0.0
  %386 = vmatpush1.msra.mxu0 0.0
  %387 = vmatprep.subr.mxu0 0.0
  %388 = vmatpush1.msra.mxu0 0.0
  %389 = vmatprep.subr.mxu0 0.0
  %390 = vmatpush1.msra.mxu0 0.0
  %391 = vmatprep.subr.mxu0 0.0
  %392 = vmatpush1.msra.mxu0 0.0
  %393 = vmatprep.subr.mxu0 0.0
  %394 = vmatpush1.msra.mxu0 0.0
  %395 = vmatprep.subr.mxu0 0.0
  %396 = vmatpush1.msra.mxu0 0.0
  %397 = vmatprep.subr.mxu0 0.0
  %398 = vmatpush1.msra.mxu0 0.0
  %399 = vmatprep.subr.mxu0 0.0
  %400 = vmatpush1.msra.mxu0 0.0
  %401 = vmatprep.subr.mxu0 0.0
  %402 = vmatpush1.msra.mxu0 0.0
  %403 = vmatprep.subr.mxu0 0.0
  %404 = vmatpush1.msra.mxu0 0.0
  %405 = vmatprep.subr.mxu0 0.0
  %406 = vmatpush1.msra.mxu0 0.0
  %407 = vmatprep.subr.mxu0 0.0
  %408 = vmatpush1.msra.mxu0 0.0
  %409 = vmatprep.subr.mxu0 0.0
  %410 = vmatpush1.msra.mxu0 0.0
  %411 = vmatprep.subr.mxu0 0.0
  %412 = vmatpush1.msra.mxu0 0.0
  %413 = vmatprep.subr.mxu0 0.0
  %414 = vmatpush1.msra.mxu0 0.0
  %415 = vmatprep.subr.mxu0 0.0
  %416 = vmatpush1.msra.mxu0 0.0
  %417 = vmatprep.subr.mxu0 0.0
  %418 = vmatpush1.msra.mxu0 0.0
  %419 = vmatprep.mubr.f32.mxu0 0.0
  %420 = vmatmul.mubr.f32.gmra.mrb[0].mxu0 %v160
  %v421 = vpop.f32.mrb[0].mxu0
  %v422 = vadd.f32 %v156, %v421
  %v423 = vpop.f32.mrb[0].mxu0
  %v424 = vadd.f32 %v156, %v423
  %425 = vdwg.mxu0
  %s426 = scalar_lea.vmem %s5, 16
  %427 = vst [vmem:[%s426] sm:$0xff] %v422
  %428 = vst [vmem:[%s426 + $0x8] sm:$0xff] %v424
  // Predicated region
  $region22: #{model_forward.1} parent=0 // pred_check
    _
  $region23: #{model_forward.1} parent=0 // pred_check_branch
    %430 = sbr.rel (0) target = $region25
  $region24: #{model_forward.1} parent=0 // pred_region
    _
  $region25: #{model_forward.1} parent=0 // pred_fallthru
    _
  // Predicated region
  $region26: #{model_forward.1} parent=0 // pred_check
    _
  $region27: #{model_forward.1} parent=0 // pred_check_branch
    %432 = sbr.rel (0) target = $region29
  $region28: #{model_forward.1} parent=0 // pred_region
    _
  $region29: #{model_forward.1} parent=0 // pred_fallthru
    _

</llo_original>
